<compile_context>
chip_gen: v5e
topology: v5e:2x2
jax: 0.10.0
libtpu: 0.0.40
codegen_flags: <defaults>
</compile_context>

<pallas_src>
import functools
import math

import jax
import jax.numpy as jnp
from jax.experimental import pallas as pl
from jax.experimental.pallas import tpu as pltpu

DROPOUT_P = 0.1
_SUBLANE = 8
_TARGET_TILE_BYTES = 4 << 20   # per-buffer tile target (double-buffered by Pallas)


def build_pe_table(d_model: int, max_len: int = 5000) -> jnp.ndarray:
    """Mirror of the PyTorch __init__ buffer, stored dense as (max_len, d_model)."""
    position = jnp.arange(0, max_len, dtype=jnp.float32)[:, None]
    div_term = jnp.exp(
        jnp.arange(0, d_model, 2, dtype=jnp.float32) * (-math.log(10000.0) / d_model))
    pe = jnp.zeros((max_len, d_model), dtype=jnp.float32)
    pe = pe.at[:, 0::2].set(jnp.sin(position * div_term))
    pe = pe.at[:, 1::2].set(jnp.cos(position * div_term))
    return pe


def _pe_kernel(x_ref, pe_ref, *rest, batch: int, with_dropout: bool):
    # x_ref: (tS, B*D)   pe_ref: (tS, D)   [mask_ref: (tS, B*D)]   o_ref: (tS, B*D)
    if with_dropout:
        mask_ref, o_ref = rest
    else:
        (o_ref,) = rest

    pe_row = pe_ref[...]
    if batch > 1:
        # Replicate the (tS, D) positional rows across batch along the lane axis.
        pe_row = jnp.concatenate([pe_row] * batch, axis=-1)        # (tS, B*D)

    y = x_ref[...] + pe_row.astype(x_ref.dtype)
    if with_dropout:
        y = y * mask_ref[...].astype(y.dtype)                      # mask in {0, 1/(1-p)}
    o_ref[...] = y.astype(o_ref.dtype)


def _choose_tile_rows(n_rows: int, row_bytes: int) -> int:
    t = max(1, _TARGET_TILE_BYTES // max(row_bytes, 1))
    if t >= n_rows:
        return n_rows                        # single block; block == full dim is legal
    return max(_SUBLANE, (t // _SUBLANE) * _SUBLANE)


def positional_encoding_forward(x, pe_table, *, rng_key=None, training=True,
                                p=DROPOUT_P):
    """dropout(x + pe[:S]) with inverted dropout.  x: (S, B, D)."""
    S, B, D = x.shape
    pe_slice = pe_table[:S]                                # (S, D) dense
    x2 = x.reshape(S, B * D)                               # lane-dense flatten (free)

    with_dropout = bool(training) and float(p) > 0.0
    inputs = [x2, pe_slice]
    if with_dropout:
        if rng_key is None:
            rng_key = jax.random.PRNGKey(0)
        keep = jax.random.bernoulli(rng_key, 1.0 - p, (S, B * D))
        inputs.append(keep.astype(jnp.float32) * jnp.float32(1.0 / (1.0 - p)))

    tS = _choose_tile_rows(S, B * D * x2.dtype.itemsize)
    grid = (pl.cdiv(S, tS),)

    row_spec = pl.BlockSpec((tS, B * D), lambda i: (i, 0))
    pe_spec = pl.BlockSpec((tS, D), lambda i: (i, 0))
    in_specs = [row_spec, pe_spec] + ([row_spec] if with_dropout else [])

    kernel = functools.partial(_pe_kernel, batch=B, with_dropout=with_dropout)

    out2 = pl.pallas_call(
        kernel,
        out_shape=jax.ShapeDtypeStruct((S, B * D), x.dtype),
        grid=grid,
        in_specs=in_specs,
        out_specs=row_spec,
        compiler_params=pltpu.CompilerParams(
            dimension_semantics=("parallel",),     # independent S tiles -> megacore
            vmem_limit_bytes=48 << 20,             # headroom vs v7x's 64 MiB VMEM
        ),
    )(*inputs)
    return out2.reshape(S, B, D)


if __name__ == "__main__":
    d_model = 32
    seq_len = 8
    batch = 2

    key = jax.random.PRNGKey(0)
    k_x, k_drop = jax.random.split(key)
    x = jax.random.normal(k_x, (seq_len, batch, d_model), dtype=jnp.float32)

    pe_table = build_pe_table(d_model, max_len=5000)

    # Eval mode: dropout is identity -> check against the pure-JAX reference.
    out_eval = jax.block_until_ready(
        positional_encoding_forward(x, pe_table, training=False))
    ref_eval = x + pe_table[:seq_len][:, None, :]
    assert out_eval.shape == (seq_len, batch, d_model)
    assert jnp.allclose(out_eval, ref_eval, atol=1e-6), "eval-mode mismatch"

    # Training mode: inverted dropout; every element must be 0 or ref/(1-p).
    out_train = jax.block_until_ready(
        positional_encoding_forward(x, pe_table, rng_key=k_drop, training=True))
    scaled = ref_eval / (1.0 - DROPOUT_P)
    ok = jnp.isclose(out_train, 0.0, atol=1e-6) | jnp.isclose(
        out_train, scaled, rtol=1e-5, atol=1e-5)
    assert bool(jnp.all(ok)), "train-mode dropout mismatch"

    print("KERNEL_OK")
</pallas_src>

<mosaic_0001>
module attributes {stable_mosaic.version = 11 : i64} {
  func.func @_pe_kernel(%arg0: i32, %arg1: memref<8x64xf32, #tpu.memory_space<vmem>>, %arg2: memref<8x32xf32, #tpu.memory_space<vmem>>, %arg3: memref<8x64xf32, #tpu.memory_space<vmem>>) attributes {dimension_semantics = [#tpu.dimension_semantics<parallel>], iteration_bounds = array<i64: 1>, scalar_prefetch = 0 : i64, scratch_operands = 0 : i64, tpu.core_type = #tpu.core_type<tc>, window_params = [{transform_indices = @transform_0, window_bounds = array<i64: 8, 64>}, {transform_indices = @transform_1, window_bounds = array<i64: 8, 32>}, {transform_indices = @transform_2, window_bounds = array<i64: 8, 64>}]} {
    %c0 = arith.constant 0 : index
    %c0_0 = arith.constant 0 : index
    %0 = vector.load %arg2[%c0, %c0_0] : memref<8x32xf32, #tpu.memory_space<vmem>>, vector<8x32xf32>
    %1 = tpu.concatenate %0, %0 in 1 : vector<8x32xf32>, vector<8x32xf32> -> vector<8x64xf32>
    %c0_1 = arith.constant 0 : index
    %c0_2 = arith.constant 0 : index
    %2 = vector.load %arg1[%c0_1, %c0_2] : memref<8x64xf32, #tpu.memory_space<vmem>>, vector<8x64xf32>
    %3 = arith.addf %2, %1 : vector<8x64xf32>
    %c0_3 = arith.constant 0 : index
    %c0_4 = arith.constant 0 : index
    %4 = vector.load %arg3[%c0_3, %c0_4] : memref<8x64xf32, #tpu.memory_space<vmem>>, vector<8x64xf32>
    tpu.vector_store %arg3[%c0_3, %c0_4], %3 {strides = array<i32>} : memref<8x64xf32, #tpu.memory_space<vmem>>, vector<8x64xf32>,
    return
  }
  func.func @transform_0(%arg0: i32) -> (i32, i32) {
    %c0_i32 = arith.constant 0 : i32
    %c0_i32_0 = arith.constant 0 : i32
    return %arg0, %c0_i32 : i32, i32
  }
  func.func @transform_1(%arg0: i32) -> (i32, i32) {
    %c0_i32 = arith.constant 0 : i32
    %c0_i32_0 = arith.constant 0 : i32
    return %arg0, %c0_i32 : i32, i32
  }
  func.func @transform_2(%arg0: i32) -> (i32, i32) {
    %c0_i32 = arith.constant 0 : i32
    %c0_i32_0 = arith.constant 0 : i32
    return %arg0, %c0_i32 : i32, i32
  }
}

</mosaic_0001>

<llo_original>
// kernel: tpu_custom_call.1
$region0: #{tpu_custom_call.1}
  #allocation0 [shape = 'u32[]', space=smem, size = 0x4, offset = 0x4, fixed_abs, tag = 'smem constant byte address 0x4 - core index']
  #allocation1 [shape = 'u32[72,128]{1,0:T(1,128)}', space=vmem, size = 0x9000, scoped, tag = 'internal scratch']
  %s0 = inlined_call_operand.hbm [shape: f32[8,64], index: 0, kind: input, shape index: {}]
  %s1 = inlined_call_operand.hbm [shape: f32[8,32], index: 1, kind: input, shape index: {}]
  %s2 = inlined_call_operand.hbm [shape: f32[8,64], index: 2, kind: output, shape index: {}]
  %s3 = sld [smem:[#allocation0]]
  $region26: #{tpu_custom_call.1} parent=0
    _
  %s5 = ssub.s32 1, %s3
  %s6 = scalar_select 0, %s5, %s3
  $region1: #{tpu_custom_call.1} parent=0
    #allocation2 [shape = 'u8[4096]{0}', space=vmem, size = 0x1000, scoped, tag = 'input window, operand 0, single buffered']
    #allocation3 [shape = 's32[1]{0}', space=sflag, size = 0x4, scoped, tag = 'scoped memory for tpu_custom_call.1']
    #allocation4 [shape = 's32[1]{0}', space=sflag, size = 0x4, scoped, tag = 'scoped memory for tpu_custom_call.1']
    #allocation5 [shape = 'u8[4096]{0}', space=vmem, size = 0x1000, scoped, tag = 'input window, operand 1, single buffered']
    #allocation6 [shape = 's32[1]{0}', space=sflag, size = 0x4, scoped, tag = 'scoped memory for tpu_custom_call.1']
    #allocation7 [shape = 'u8[4096]{0}', space=vmem, size = 0x1000, scoped, tag = 'output window, operand 0, single buffered']
    %7 = vsyncpa [#allocation3], 0
    %8 = vsyncpa [#allocation6], 0
    %9 = vsyncpa [#allocation4], 0
    // Predicated region
    $region2: #{tpu_custom_call.1} parent=1 // pred_check
      _
    $region3: #{tpu_custom_call.1} parent=1 // pred_check_branch
      %11 = sbr.rel (0) target = $region5
    $region4: #{tpu_custom_call.1} parent=1 // pred_region
      %13 = vsyncadd [#allocation3], 0
      %s15 = sshll.u32 %s0, 4
      %s16 = int_to_ptr.hbm [resolvable:$true] %s15
      %s17 = sshll.u32 [#allocation2], 4
      %s18 = int_to_ptr.vmem [resolvable:$true] %s17
      %20 = dma.hbm_to_vmem [thread:$0]  %s16, 128, %s18, [#allocation3]
    $region5: #{tpu_custom_call.1} parent=1 // pred_fallthru
      _
    // Predicated region
    $region6: #{tpu_custom_call.1} parent=1 // pred_check
      _
    $region7: #{tpu_custom_call.1} parent=1 // pred_check_branch
      %22 = sbr.rel (0) target = $region9
    $region8: #{tpu_custom_call.1} parent=1 // pred_region
      %24 = vsyncadd [#allocation6], 0
      %s26 = sshll.u32 %s1, 4
      %s27 = int_to_ptr.hbm [resolvable:$true] %s26
      %s28 = sshll.u32 [#allocation5], 4
      %s29 = int_to_ptr.vmem [resolvable:$true] %s28
      %31 = dma.hbm_to_vmem [thread:$0]  %s27, 128, %s29, [#allocation6]
    $region9: #{tpu_custom_call.1} parent=1 // pred_fallthru
      _
    // Predicated region
    $region10: #{tpu_custom_call.1} parent=1 // pred_check
      _
    $region11: #{tpu_custom_call.1} parent=1 // pred_check_branch
      %33 = sbr.rel (0) target = $region13
    $region12: #{tpu_custom_call.1} parent=1 // pred_region
      %35 = dma.done [#allocation3], 128
    $region13: #{tpu_custom_call.1} parent=1 // pred_fallthru
      _
    // Predicated region
    $region14: #{tpu_custom_call.1} parent=1 // pred_check
      _
    $region15: #{tpu_custom_call.1} parent=1 // pred_check_branch
      %37 = sbr.rel (0) target = $region17
    $region16: #{tpu_custom_call.1} parent=1 // pred_region
      %39 = dma.done [#allocation6], 128
    $region17: #{tpu_custom_call.1} parent=1 // pred_fallthru
      _
    %v40 = vld [vmem:[#allocation5] sm:$0xff]
    %42 = vrot.lane.b32.xlu0 %v40, 32
    %v43 = vpop.permute.xlu0 %42
    %vm45 = vcmask 261120
    %v46 = vsel %vm45, %v40, %v43
    %v47 = vld [vmem:[#allocation2] sm:$0xff]
    %v48 = vadd.f32 %v47, %v46
    %vm49 = vcmask 523264
    %50 = vst.msk [vmem:[#allocation7] sm:$0xff] %vm49, %v48
    // Predicated region
    $region18: #{tpu_custom_call.1} parent=1 // pred_check
      _
    $region19: #{tpu_custom_call.1} parent=1 // pred_check_branch
      %52 = sbr.rel (0) target = $region21
    $region20: #{tpu_custom_call.1} parent=1 // pred_region
      %54 = vsyncadd [#allocation4], 0
      %s56 = sshll.u32 [#allocation7], 4
      %s57 = int_to_ptr.vmem [resolvable:$true] %s56
      %s58 = sshll.u32 %s2, 4
      %s59 = int_to_ptr.hbm [resolvable:$true] %s58
      %61 = dma.vmem_to_hbm [thread:$0]  %s57, 128, %s59, [#allocation4]
    $region21: #{tpu_custom_call.1} parent=1 // pred_fallthru
      _
    // Predicated region
    $region22: #{tpu_custom_call.1} parent=1 // pred_check
      _
    $region23: #{tpu_custom_call.1} parent=1 // pred_check_branch
      %63 = sbr.rel (0) target = $region25
    $region24: #{tpu_custom_call.1} parent=1 // pred_region
      %65 = dma.done [#allocation4], 128
    $region25: #{tpu_custom_call.1} parent=1 // pred_fallthru
      _
    %66 = vsyncpa [#allocation3], 1
    %67 = vsyncpa [#allocation6], 1
    %68 = vsyncpa [#allocation4], 1

</llo_original>
